<compile_context>
chip_gen: v5e
topology: v5e:2x2
jax: 0.10.0
libtpu: 0.0.40
codegen_flags: <defaults>
</compile_context>

<pallas_src>
import functools

import jax
import jax.numpy as jnp
from jax.experimental import pallas as pl
from jax.experimental.pallas import tpu as pltpu


# ----------------------------------------------------------------------------
# Kernel
# ----------------------------------------------------------------------------
def qnetwork_kernel(x_ref, w_in_ref, w_big_ref, b_ref, o_ref, *,
                    action_size, n_big):
    """Fused MLP: trunk + duplicated neck + block-diagonal heads + dueling combine.

    x_ref:     (bb, state_size)      f32
    w_in_ref:  (state_size, W)       bf16
    w_big_ref: (n_big, W, W)         bf16   (trunk x3, neck, head x3, fused final)
    b_ref:     (n_big + 1, W)        f32
    o_ref:     (bb, W)               f32    q in lanes [0, action_size)
    """
    # Input layer: bf16 matmul, f32 accumulate, f32 bias/ReLU.
    h = jnp.dot(x_ref[...].astype(jnp.bfloat16), w_in_ref[...],
                preferred_element_type=jnp.float32) + b_ref[0:1, :]
    h = jnp.maximum(h, 0.0)

    # Remaining 8 fused layers (last one has no ReLU).
    for i in range(n_big):
        h = jnp.dot(h.astype(jnp.bfloat16), w_big_ref[i],
                    preferred_element_type=jnp.float32) + b_ref[i + 1:i + 2, :]
        if i < n_big - 1:
            h = jnp.maximum(h, 0.0)

    # After the final fused layer:
    #   lanes [0, action_size)  -> advantage A
    #   lane  action_size       -> value V
    #   remaining lanes         -> exact zeros
    bb, width = h.shape
    lane = jax.lax.broadcasted_iota(jnp.int32, (bb, width), 1)
    a_mask = lane < action_size
    v = h[:, action_size:action_size + 1]                      # (bb, 1)
    a = jnp.where(a_mask, h, 0.0)
    a_mean = jnp.sum(a, axis=1, keepdims=True) * (1.0 / action_size)
    q = jnp.where(a_mask, h + v - a_mean, 0.0)                  # lane-dense slab
    o_ref[...] = q.astype(o_ref.dtype)


# ----------------------------------------------------------------------------
# Parameter init (PyTorch-like layer shapes; W pre-transposed to (in, out))
# ----------------------------------------------------------------------------
def init_qnetwork_params(key, state_size, action_size, fc1_units=128, fc2_units=16):
    layer_dims = (
        [(state_size, fc1_units)] + [(fc1_units, fc1_units)] * 3 + [(fc1_units, fc2_units)]
        + [(fc2_units, fc2_units)] * 3 + [(fc2_units, 1)]
        + [(fc2_units, fc2_units)] * 3 + [(fc2_units, action_size)]
    )
    params = []
    for (fan_in, fan_out) in layer_dims:
        key, kw, kb = jax.random.split(key, 3)
        bound = 1.0 / jnp.sqrt(jnp.float32(fan_in))
        w = jax.random.uniform(kw, (fan_in, fan_out), jnp.float32, -bound, bound)
        b = jax.random.uniform(kb, (1, fan_out), jnp.float32, -bound, bound)
        params.append((w, b))
    return params


# ----------------------------------------------------------------------------
# One-time host-side parameter packing (fusion + lane padding + bf16 weights)
# ----------------------------------------------------------------------------
def pack_params(params, state_size, action_size, fc1_units=128, fc2_units=16):
    f1, f2 = fc1_units, fc2_units
    width = max(f1, 2 * f2, action_size + 1)
    width = ((width + 127) // 128) * 128            # lane-dense pad

    common, value, adv = params[:5], params[5:9], params[9:13]
    zeros2 = lambda: jnp.zeros((width, width), jnp.float32)
    zeros1 = lambda: jnp.zeros((width,), jnp.float32)

    # Input layer (state_size -> fc1).
    w_in = jnp.zeros((state_size, width), jnp.float32).at[:, :f1].set(common[0][0])
    biases = [zeros1().at[:f1].set(common[0][1].reshape(-1))]

    big = []
    # Trunk layers 1..3 (fc1 -> fc1).
    for w, b in common[1:4]:
        big.append(zeros2().at[:f1, :f1].set(w))
        biases.append(zeros1().at[:f1].set(b.reshape(-1)))

    # Neck (fc1 -> fc2), output duplicated so lanes [0,f2)=[f2,2f2)=h2.
    w4, b4 = common[4]
    big.append(zeros2().at[:f1, :f2].set(w4).at[:f1, f2:2 * f2].set(w4))
    biases.append(zeros1().at[:f2].set(b4.reshape(-1)).at[f2:2 * f2].set(b4.reshape(-1)))

    # Head hidden layers: block-diagonal [value | advantage].
    for (wv, bv), (wa, ba) in zip(value[:3], adv[:3]):
        big.append(zeros2().at[:f2, :f2].set(wv).at[f2:2 * f2, f2:2 * f2].set(wa))
        biases.append(zeros1().at[:f2].set(bv.reshape(-1)).at[f2:2 * f2].set(ba.reshape(-1)))

    # Final fused layer: A -> lanes [0, action_size), V -> lane action_size.
    wv, bv = value[3]
    wa, ba = adv[3]
    big.append(zeros2()
               .at[f2:2 * f2, :action_size].set(wa)
               .at[:f2, action_size:action_size + 1].set(wv))
    biases.append(zeros1()
                  .at[:action_size].set(ba.reshape(-1))
                  .at[action_size].set(bv.reshape(-1)[0]))

    w_in = w_in.astype(jnp.bfloat16)
    w_big = jnp.stack(big).astype(jnp.bfloat16)        # (8, W, W)
    b_all = jnp.stack(biases).astype(jnp.float32)      # (9, W)
    return w_in, w_big, b_all


# ----------------------------------------------------------------------------
# Forward wrapper
# ----------------------------------------------------------------------------
@functools.partial(jax.jit, static_argnames=("action_size",))
def qnetwork_forward(x, w_in, w_big, biases, *, action_size):
    B, S = x.shape
    n_big, width, _ = w_big.shape

    # Batch tiling: a single block for small B, 256-row tiles (parallel over
    # TensorCores on v7x) for large B. Weights stay resident (constant maps).
    bb = B if B <= 512 else 256
    grid = (pl.cdiv(B, bb),)

    kern = functools.partial(qnetwork_kernel, action_size=action_size, n_big=n_big)
    q_pad = pl.pallas_call(
        kern,
        out_shape=jax.ShapeDtypeStruct((B, width), jnp.float32),
        grid=grid,
        in_specs=[
            pl.BlockSpec((bb, S), lambda i: (i, 0)),
            pl.BlockSpec((S, width), lambda i: (0, 0)),
            pl.BlockSpec((n_big, width, width), lambda i: (0, 0, 0)),
            pl.BlockSpec((n_big + 1, width), lambda i: (0, 0)),
        ],
        out_specs=pl.BlockSpec((bb, width), lambda i: (i, 0)),
        compiler_params=pltpu.CompilerParams(dimension_semantics=("parallel",)),
    )(x, w_in, w_big, biases)
    return q_pad[:, :action_size]


# ----------------------------------------------------------------------------
# Pure-JAX reference (original unfused layer structure, same bf16/f32 math)
# ----------------------------------------------------------------------------
def qnetwork_reference(x, params):
    def lin(h, w, b):
        return jnp.dot(h.astype(jnp.bfloat16), w.astype(jnp.bfloat16),
                       preferred_element_type=jnp.float32) + b

    common_p, value_p, adv_p = params[:5], params[5:9], params[9:13]
    h = x.astype(jnp.float32)
    for w, b in common_p:
        h = jnp.maximum(lin(h, w, b), 0.0)
    v = h
    for w, b in value_p[:-1]:
        v = jnp.maximum(lin(v, w, b), 0.0)
    v = lin(v, *value_p[-1])
    a = h
    for w, b in adv_p[:-1]:
        a = jnp.maximum(lin(a, w, b), 0.0)
    a = lin(a, *adv_p[-1])
    return v + a - jnp.mean(a, axis=1, keepdims=True)


if __name__ == "__main__":
    state_size = 32
    action_size = 8
    batch = 8

    key = jax.random.PRNGKey(0)
    key, kx = jax.random.split(key)
    x = jax.random.normal(kx, (batch, state_size), jnp.float32)

    params = init_qnetwork_params(key, state_size, action_size)
    w_in, w_big, b_all = pack_params(params, state_size, action_size)

    q = qnetwork_forward(x, w_in, w_big, b_all, action_size=action_size)
    q = jax.block_until_ready(q)

    q_ref = qnetwork_reference(x, params)
    assert q.shape == (batch, action_size)
    assert jnp.allclose(q, q_ref, atol=1e-3, rtol=1e-3), "mismatch vs reference"

    print("KERNEL_OK")
</pallas_src>

<mosaic_0001>
module attributes {stable_mosaic.version = 11 : i64} {
  func.func @qnetwork_kernel(%arg0: i32, %arg1: memref<8x32xf32, #tpu.memory_space<vmem>>, %arg2: memref<32x128xbf16, #tpu.memory_space<vmem>>, %arg3: memref<8x128x128xbf16, #tpu.memory_space<vmem>>, %arg4: memref<9x128xf32, #tpu.memory_space<vmem>>, %arg5: memref<8x128xf32, #tpu.memory_space<vmem>>) attributes {dimension_semantics = [#tpu.dimension_semantics<parallel>], iteration_bounds = array<i64: 1>, scalar_prefetch = 0 : i64, scratch_operands = 0 : i64, tpu.core_type = #tpu.core_type<tc>, window_params = [{transform_indices = @transform_0, window_bounds = array<i64: 8, 32>}, {pipeline_mode = #tpu.pipeline_mode<synchronous>, transform_indices = @transform_1, window_bounds = array<i64: 32, 128>}, {pipeline_mode = #tpu.pipeline_mode<synchronous>, transform_indices = @transform_2, window_bounds = array<i64: 8, 128, 128>}, {pipeline_mode = #tpu.pipeline_mode<synchronous>, transform_indices = @transform_3, window_bounds = array<i64: 9, 128>}, {transform_indices = @transform_4, window_bounds = array<i64: 8, 128>}]} {
    %c0 = arith.constant 0 : index
    %c0_0 = arith.constant 0 : index
    %0 = vector.load %arg1[%c0, %c0_0] : memref<8x32xf32, #tpu.memory_space<vmem>>, vector<8x32xf32>
    %1 = arith.truncf %0 : vector<8x32xf32> to vector<8x32xbf16>
    %c0_1 = arith.constant 0 : index
    %c0_2 = arith.constant 0 : index
    %2 = vector.load %arg2[%c0_1, %c0_2] : memref<32x128xbf16, #tpu.memory_space<vmem>>, vector<32x128xbf16>
    %cst = arith.constant dense<0.000000e+00> : vector<8x128xf32>
    %3 = tpu.matmul %1, %2, %cst {dimension_numbers = #tpu.dot_dimension_numbers<[1], [0], [0], [1], [0, 0, 1, 1], [], []>} : vector<8x32xbf16>, vector<32x128xbf16>, vector<8x128xf32> -> vector<8x128xf32>
    %c0_3 = arith.constant 0 : index
    %c0_4 = arith.constant 0 : index
    %4 = vector.load %arg4[%c0_3, %c0_4] : memref<9x128xf32, #tpu.memory_space<vmem>>, vector<1x128xf32>
    %5 = vector.broadcast %4 : vector<1x128xf32> to vector<8x128xf32>
    %6 = arith.addf %3, %5 : vector<8x128xf32>
    %cst_5 = arith.constant 0.000000e+00 : f32
    %7 = vector.broadcast %cst_5 : f32 to vector<8x128xf32>
    %8 = arith.maximumf %6, %7 : vector<8x128xf32>
    %9 = arith.truncf %8 : vector<8x128xf32> to vector<8x128xbf16>
    %c0_6 = arith.constant 0 : index
    %c0_7 = arith.constant 0 : index
    %c0_8 = arith.constant 0 : index
    %10 = vector.load %arg3[%c0_6, %c0_7, %c0_8] : memref<8x128x128xbf16, #tpu.memory_space<vmem>>, vector<1x128x128xbf16>
    %11 = vector.shape_cast %10 : vector<1x128x128xbf16> to vector<128x128xbf16>
    %cst_9 = arith.constant dense<0.000000e+00> : vector<8x128xf32>
    %12 = tpu.matmul %9, %11, %cst_9 {dimension_numbers = #tpu.dot_dimension_numbers<[1], [0], [0], [1], [0, 0, 1, 1], [], []>} : vector<8x128xbf16>, vector<128x128xbf16>, vector<8x128xf32> -> vector<8x128xf32>
    %c1 = arith.constant 1 : index
    %c0_10 = arith.constant 0 : index
    %13 = vector.load %arg4[%c1, %c0_10] : memref<9x128xf32, #tpu.memory_space<vmem>>, vector<1x128xf32>
    %14 = vector.broadcast %13 : vector<1x128xf32> to vector<8x128xf32>
    %15 = arith.addf %12, %14 : vector<8x128xf32>
    %cst_11 = arith.constant 0.000000e+00 : f32
    %16 = vector.broadcast %cst_11 : f32 to vector<8x128xf32>
    %17 = arith.maximumf %15, %16 : vector<8x128xf32>
    %18 = arith.truncf %17 : vector<8x128xf32> to vector<8x128xbf16>
    %c1_12 = arith.constant 1 : index
    %c0_13 = arith.constant 0 : index
    %c0_14 = arith.constant 0 : index
    %19 = vector.load %arg3[%c1_12, %c0_13, %c0_14] : memref<8x128x128xbf16, #tpu.memory_space<vmem>>, vector<1x128x128xbf16>
    %20 = vector.shape_cast %19 : vector<1x128x128xbf16> to vector<128x128xbf16>
    %cst_15 = arith.constant dense<0.000000e+00> : vector<8x128xf32>
    %21 = tpu.matmul %18, %20, %cst_15 {dimension_numbers = #tpu.dot_dimension_numbers<[1], [0], [0], [1], [0, 0, 1, 1], [], []>} : vector<8x128xbf16>, vector<128x128xbf16>, vector<8x128xf32> -> vector<8x128xf32>
    %c2 = arith.constant 2 : index
    %c0_16 = arith.constant 0 : index
    %22 = vector.load %arg4[%c2, %c0_16] : memref<9x128xf32, #tpu.memory_space<vmem>>, vector<1x128xf32>
    %23 = vector.broadcast %22 : vector<1x128xf32> to vector<8x128xf32>
    %24 = arith.addf %21, %23 : vector<8x128xf32>
    %cst_17 = arith.constant 0.000000e+00 : f32
    %25 = vector.broadcast %cst_17 : f32 to vector<8x128xf32>
    %26 = arith.maximumf %24, %25 : vector<8x128xf32>
    %27 = arith.truncf %26 : vector<8x128xf32> to vector<8x128xbf16>
    %c2_18 = arith.constant 2 : index
    %c0_19 = arith.constant 0 : index
    %c0_20 = arith.constant 0 : index
    %28 = vector.load %arg3[%c2_18, %c0_19, %c0_20] : memref<8x128x128xbf16, #tpu.memory_space<vmem>>, vector<1x128x128xbf16>
    %29 = vector.shape_cast %28 : vector<1x128x128xbf16> to vector<128x128xbf16>
    %cst_21 = arith.constant dense<0.000000e+00> : vector<8x128xf32>
    %30 = tpu.matmul %27, %29, %cst_21 {dimension_numbers = #tpu.dot_dimension_numbers<[1], [0], [0], [1], [0, 0, 1, 1], [], []>} : vector<8x128xbf16>, vector<128x128xbf16>, vector<8x128xf32> -> vector<8x128xf32>
    %c3 = arith.constant 3 : index
    %c0_22 = arith.constant 0 : index
    %31 = vector.load %arg4[%c3, %c0_22] : memref<9x128xf32, #tpu.memory_space<vmem>>, vector<1x128xf32>
    %32 = vector.broadcast %31 : vector<1x128xf32> to vector<8x128xf32>
    %33 = arith.addf %30, %32 : vector<8x128xf32>
    %cst_23 = arith.constant 0.000000e+00 : f32
    %34 = vector.broadcast %cst_23 : f32 to vector<8x128xf32>
    %35 = arith.maximumf %33, %34 : vector<8x128xf32>
    %36 = arith.truncf %35 : vector<8x128xf32> to vector<8x128xbf16>
    %c3_24 = arith.constant 3 : index
    %c0_25 = arith.constant 0 : index
    %c0_26 = arith.constant 0 : index
    %37 = vector.load %arg3[%c3_24, %c0_25, %c0_26] : memref<8x128x128xbf16, #tpu.memory_space<vmem>>, vector<1x128x128xbf16>
    %38 = vector.shape_cast %37 : vector<1x128x128xbf16> to vector<128x128xbf16>
    %cst_27 = arith.constant dense<0.000000e+00> : vector<8x128xf32>
    %39 = tpu.matmul %36, %38, %cst_27 {dimension_numbers = #tpu.dot_dimension_numbers<[1], [0], [0], [1], [0, 0, 1, 1], [], []>} : vector<8x128xbf16>, vector<128x128xbf16>, vector<8x128xf32> -> vector<8x128xf32>
    %c4 = arith.constant 4 : index
    %c0_28 = arith.constant 0 : index
    %40 = vector.load %arg4[%c4, %c0_28] : memref<9x128xf32, #tpu.memory_space<vmem>>, vector<1x128xf32>
    %41 = vector.broadcast %40 : vector<1x128xf32> to vector<8x128xf32>
    %42 = arith.addf %39, %41 : vector<8x128xf32>
    %cst_29 = arith.constant 0.000000e+00 : f32
    %43 = vector.broadcast %cst_29 : f32 to vector<8x128xf32>
    %44 = arith.maximumf %42, %43 : vector<8x128xf32>
    %45 = arith.truncf %44 : vector<8x128xf32> to vector<8x128xbf16>
    %c4_30 = arith.constant 4 : index
    %c0_31 = arith.constant 0 : index
    %c0_32 = arith.constant 0 : index
    %46 = vector.load %arg3[%c4_30, %c0_31, %c0_32] : memref<8x128x128xbf16, #tpu.memory_space<vmem>>, vector<1x128x128xbf16>
    %47 = vector.shape_cast %46 : vector<1x128x128xbf16> to vector<128x128xbf16>
    %cst_33 = arith.constant dense<0.000000e+00> : vector<8x128xf32>
    %48 = tpu.matmul %45, %47, %cst_33 {dimension_numbers = #tpu.dot_dimension_numbers<[1], [0], [0], [1], [0, 0, 1, 1], [], []>} : vector<8x128xbf16>, vector<128x128xbf16>, vector<8x128xf32> -> vector<8x128xf32>
    %c5 = arith.constant 5 : index
    %c0_34 = arith.constant 0 : index
    %49 = vector.load %arg4[%c5, %c0_34] : memref<9x128xf32, #tpu.memory_space<vmem>>, vector<1x128xf32>
    %50 = vector.broadcast %49 : vector<1x128xf32> to vector<8x128xf32>
    %51 = arith.addf %48, %50 : vector<8x128xf32>
    %cst_35 = arith.constant 0.000000e+00 : f32
    %52 = vector.broadcast %cst_35 : f32 to vector<8x128xf32>
    %53 = arith.maximumf %51, %52 : vector<8x128xf32>
    %54 = arith.truncf %53 : vector<8x128xf32> to vector<8x128xbf16>
    %c5_36 = arith.constant 5 : index
    %c0_37 = arith.constant 0 : index
    %c0_38 = arith.constant 0 : index
    %55 = vector.load %arg3[%c5_36, %c0_37, %c0_38] : memref<8x128x128xbf16, #tpu.memory_space<vmem>>, vector<1x128x128xbf16>
    %56 = vector.shape_cast %55 : vector<1x128x128xbf16> to vector<128x128xbf16>
    %cst_39 = arith.constant dense<0.000000e+00> : vector<8x128xf32>
    %57 = tpu.matmul %54, %56, %cst_39 {dimension_numbers = #tpu.dot_dimension_numbers<[1], [0], [0], [1], [0, 0, 1, 1], [], []>} : vector<8x128xbf16>, vector<128x128xbf16>, vector<8x128xf32> -> vector<8x128xf32>
    %c6 = arith.constant 6 : index
    %c0_40 = arith.constant 0 : index
    %58 = vector.load %arg4[%c6, %c0_40] : memref<9x128xf32, #tpu.memory_space<vmem>>, vector<1x128xf32>
    %59 = vector.broadcast %58 : vector<1x128xf32> to vector<8x128xf32>
    %60 = arith.addf %57, %59 : vector<8x128xf32>
    %cst_41 = arith.constant 0.000000e+00 : f32
    %61 = vector.broadcast %cst_41 : f32 to vector<8x128xf32>
    %62 = arith.maximumf %60, %61 : vector<8x128xf32>
    %63 = arith.truncf %62 : vector<8x128xf32> to vector<8x128xbf16>
    %c6_42 = arith.constant 6 : index
    %c0_43 = arith.constant 0 : index
    %c0_44 = arith.constant 0 : index
    %64 = vector.load %arg3[%c6_42, %c0_43, %c0_44] : memref<8x128x128xbf16, #tpu.memory_space<vmem>>, vector<1x128x128xbf16>
    %65 = vector.shape_cast %64 : vector<1x128x128xbf16> to vector<128x128xbf16>
    %cst_45 = arith.constant dense<0.000000e+00> : vector<8x128xf32>
    %66 = tpu.matmul %63, %65, %cst_45 {dimension_numbers = #tpu.dot_dimension_numbers<[1], [0], [0], [1], [0, 0, 1, 1], [], []>} : vector<8x128xbf16>, vector<128x128xbf16>, vector<8x128xf32> -> vector<8x128xf32>
    %c7 = arith.constant 7 : index
    %c0_46 = arith.constant 0 : index
    %67 = vector.load %arg4[%c7, %c0_46] : memref<9x128xf32, #tpu.memory_space<vmem>>, vector<1x128xf32>
    %68 = vector.broadcast %67 : vector<1x128xf32> to vector<8x128xf32>
    %69 = arith.addf %66, %68 : vector<8x128xf32>
    %cst_47 = arith.constant 0.000000e+00 : f32
    %70 = vector.broadcast %cst_47 : f32 to vector<8x128xf32>
    %71 = arith.maximumf %69, %70 : vector<8x128xf32>
    %72 = arith.truncf %71 : vector<8x128xf32> to vector<8x128xbf16>
    %c7_48 = arith.constant 7 : index
    %c0_49 = arith.constant 0 : index
    %c0_50 = arith.constant 0 : index
    %73 = vector.load %arg3[%c7_48, %c0_49, %c0_50] : memref<8x128x128xbf16, #tpu.memory_space<vmem>>, vector<1x128x128xbf16>
    %74 = vector.shape_cast %73 : vector<1x128x128xbf16> to vector<128x128xbf16>
    %cst_51 = arith.constant dense<0.000000e+00> : vector<8x128xf32>
    %75 = tpu.matmul %72, %74, %cst_51 {dimension_numbers = #tpu.dot_dimension_numbers<[1], [0], [0], [1], [0, 0, 1, 1], [], []>} : vector<8x128xbf16>, vector<128x128xbf16>, vector<8x128xf32> -> vector<8x128xf32>
    %c8 = arith.constant 8 : index
    %c0_52 = arith.constant 0 : index
    %76 = vector.load %arg4[%c8, %c0_52] : memref<9x128xf32, #tpu.memory_space<vmem>>, vector<1x128xf32>
    %77 = vector.broadcast %76 : vector<1x128xf32> to vector<8x128xf32>
    %78 = arith.addf %75, %77 : vector<8x128xf32>
    %79 = tpu.iota {dimensions = array<i32: 1>} : vector<8x128xi32>
    %c8_i32 = arith.constant 8 : i32
    %80 = vector.broadcast %c8_i32 : i32 to vector<8x128xi32>
    %81 = arith.cmpi slt, %79, %80 : vector<8x128xi32>
    %82 = vector.extract_strided_slice %78 {offsets = [0, 8], sizes = [8, 1], strides = [1, 1]} : vector<8x128xf32> to vector<8x1xf32>
    %cst_53 = arith.constant 0.000000e+00 : f32
    %83 = vector.broadcast %cst_53 : f32 to vector<8x128xf32>
    %84 = arith.select %81, %78, %83 : vector<8x128xi1>, vector<8x128xf32>
    %cst_54 = arith.constant dense<0.000000e+00> : vector<8xf32>
    %85 = vector.multi_reduction <add>, %84, %cst_54 [1] : vector<8x128xf32> to vector<8xf32>
    %86 = vector.shape_cast %85 : vector<8xf32> to vector<8x1xf32>
    %cst_55 = arith.constant 1.250000e-01 : f32
    %87 = vector.broadcast %cst_55 : f32 to vector<8x1xf32>
    %88 = arith.mulf %86, %87 : vector<8x1xf32>
    %89 = vector.broadcast %82 : vector<8x1xf32> to vector<8x128xf32>
    %90 = arith.addf %78, %89 : vector<8x128xf32>
    %91 = vector.broadcast %88 : vector<8x1xf32> to vector<8x128xf32>
    %92 = arith.subf %90, %91 : vector<8x128xf32>
    %cst_56 = arith.constant 0.000000e+00 : f32
    %93 = vector.broadcast %cst_56 : f32 to vector<8x128xf32>
    %94 = arith.select %81, %92, %93 : vector<8x128xi1>, vector<8x128xf32>
    %c0_57 = arith.constant 0 : index
    %c0_58 = arith.constant 0 : index
    %95 = vector.load %arg5[%c0_57, %c0_58] : memref<8x128xf32, #tpu.memory_space<vmem>>, vector<8x128xf32>
    tpu.vector_store %arg5[%c0_57, %c0_58], %94 {strides = array<i32>} : memref<8x128xf32, #tpu.memory_space<vmem>>, vector<8x128xf32>,
    return
  }
  func.func @transform_0(%arg0: i32) -> (i32, i32) {
    %c0_i32 = arith.constant 0 : i32
    %c0_i32_0 = arith.constant 0 : i32
    return %arg0, %c0_i32 : i32, i32
  }
  func.func @transform_1(%arg0: i32) -> (i32, i32) {
    %c0_i32 = arith.constant 0 : i32
    %c0_i32_0 = arith.constant 0 : i32
    %c0_i32_1 = arith.constant 0 : i32
    return %c0_i32, %c0_i32_0 : i32, i32
  }
  func.func @transform_2(%arg0: i32) -> (i32, i32, i32) {
    %c0_i32 = arith.constant 0 : i32
    %c0_i32_0 = arith.constant 0 : i32
    %c0_i32_1 = arith.constant 0 : i32
    %c0_i32_2 = arith.constant 0 : i32
    return %c0_i32, %c0_i32_0, %c0_i32_1 : i32, i32, i32
  }
  func.func @transform_3(%arg0: i32) -> (i32, i32) {
    %c0_i32 = arith.constant 0 : i32
    %c0_i32_0 = arith.constant 0 : i32
    %c0_i32_1 = arith.constant 0 : i32
    return %c0_i32, %c0_i32_0 : i32, i32
  }
  func.func @transform_4(%arg0: i32) -> (i32, i32) {
    %c0_i32 = arith.constant 0 : i32
    %c0_i32_0 = arith.constant 0 : i32
    return %arg0, %c0_i32 : i32, i32
  }
}

</mosaic_0001>

<llo_original>
// kernel: qnetwork_forward.1
$region0: #{qnetwork_forward.1}
  #allocation0 [shape = 'u32[]', space=smem, size = 0x4, offset = 0x4, fixed_abs, tag = 'smem constant byte address 0x4 - core index']
  #allocation1 [shape = 'u32[72,128]{1,0:T(1,128)}', space=vmem, size = 0x9000, scoped, tag = 'internal scratch']
  %s0 = inlined_call_operand.hbm [shape: f32[8,32], index: 0, kind: input, shape index: {}]
  %s1 = inlined_call_operand.hbm [shape: bf16[32,128], index: 1, kind: input, shape index: {}]
  %s2 = inlined_call_operand.hbm [shape: bf16[8,128,128], index: 2, kind: input, shape index: {}]
  %s3 = inlined_call_operand.hbm [shape: f32[9,128], index: 3, kind: input, shape index: {}]
  %s4 = inlined_call_operand.hbm [shape: f32[8,128], index: 4, kind: output, shape index: {}]
  %s5 = sld [smem:[#allocation0]]
  $region42: #{qnetwork_forward.1} parent=0
    _
  %s7 = ssub.s32 1, %s5
  %s8 = scalar_select 0, %s7, %s5
  $region1: #{qnetwork_forward.1} parent=0
    #allocation2 [shape = 'u8[4096]{0}', space=vmem, size = 0x1000, scoped, tag = 'input window, operand 0, single buffered']
    #allocation3 [shape = 's32[1]{0}', space=sflag, size = 0x4, scoped, tag = 'scoped memory for qnetwork_forward.1']
    #allocation4 [shape = 's32[1]{0}', space=sflag, size = 0x4, scoped, tag = 'scoped memory for qnetwork_forward.1']
    #allocation5 [shape = 'u8[8192]{0}', space=vmem, size = 0x2000, scoped, tag = 'input window, operand 1, single buffered']
    #allocation6 [shape = 's32[1]{0}', space=sflag, size = 0x4, scoped, tag = 'scoped memory for qnetwork_forward.1']
    #allocation7 [shape = 'u8[262144]{0}', space=vmem, size = 0x40000, scoped, tag = 'input window, operand 2, single buffered']
    #allocation8 [shape = 'u8[8192]{0}', space=vmem, size = 0x2000, scoped, tag = 'input window, operand 3, single buffered']
    #allocation9 [shape = 's32[1]{0}', space=sflag, size = 0x4, scoped, tag = 'scoped memory for qnetwork_forward.1']
    #allocation10 [shape = 'u8[4096]{0}', space=vmem, size = 0x1000, scoped, tag = 'output window, operand 0, single buffered']
    %9 = vsyncpa [#allocation3], 0
    %10 = vsyncpa [#allocation6], 0
    %11 = vsyncpa [#allocation9], 0
    %12 = vsyncpa [#allocation4], 0
    // Predicated region
    $region2: #{qnetwork_forward.1} parent=1 // pred_check
      _
    $region3: #{qnetwork_forward.1} parent=1 // pred_check_branch
      %14 = sbr.rel (0) target = $region5
    $region4: #{qnetwork_forward.1} parent=1 // pred_region
      %16 = vsyncadd [#allocation3], 0
      %s18 = sshll.u32 %s0, 4
      %s19 = int_to_ptr.hbm [resolvable:$true] %s18
      %s20 = sshll.u32 [#allocation2], 4
      %s21 = int_to_ptr.vmem [resolvable:$true] %s20
      %23 = dma.hbm_to_vmem [thread:$0]  %s19, 128, %s21, [#allocation3]
    $region5: #{qnetwork_forward.1} parent=1 // pred_fallthru
      _
    // Predicated region
    $region6: #{qnetwork_forward.1} parent=1 // pred_check
      _
    $region7: #{qnetwork_forward.1} parent=1 // pred_check_branch
      %25 = sbr.rel (0) target = $region9
    $region8: #{qnetwork_forward.1} parent=1 // pred_region
      %27 = vsyncadd [#allocation6], 0
      %s28 = sshll.u32 %s1, 4
      %s29 = int_to_ptr.hbm [resolvable:$true] %s28
      %s30 = sshll.u32 [#allocation5], 4
      %s31 = int_to_ptr.vmem [resolvable:$true] %s30
      %36 = dma.hbm_to_vmem [thread:$0]  %s29, 256, %s31, [#allocation6], 64, 64, 4
    $region9: #{qnetwork_forward.1} parent=1 // pred_fallthru
      _
    // Predicated region
    $region10: #{qnetwork_forward.1} parent=1 // pred_check
      _
    $region11: #{qnetwork_forward.1} parent=1 // pred_check_branch
      %38 = sbr.rel (0) target = $region13
    $region12: #{qnetwork_forward.1} parent=1 // pred_region
      %40 = vsyncadd [#allocation6], 0
      %s41 = sshll.u32 %s2, 4
      %s42 = int_to_ptr.hbm [resolvable:$true] %s41
      %s43 = sshll.u32 [#allocation7], 4
      %s44 = int_to_ptr.vmem [resolvable:$true] %s43
      %49 = dma.hbm_to_vmem [thread:$0]  %s42, 8192, %s44, [#allocation6], 64, 64, 4
    $region13: #{qnetwork_forward.1} parent=1 // pred_fallthru
      _
    // Predicated region
    $region14: #{qnetwork_forward.1} parent=1 // pred_check
      _
    $region15: #{qnetwork_forward.1} parent=1 // pred_check_branch
      %51 = sbr.rel (0) target = $region17
    $region16: #{qnetwork_forward.1} parent=1 // pred_region
      %53 = vsyncadd [#allocation9], 0
      %s54 = sshll.u32 %s3, 4
      %s55 = int_to_ptr.hbm [resolvable:$true] %s54
      %s56 = sshll.u32 [#allocation8], 4
      %s57 = int_to_ptr.vmem [resolvable:$true] %s56
      %62 = dma.hbm_to_vmem [thread:$0]  %s55, 256, %s57, [#allocation9], 128, 128, 8
    $region17: #{qnetwork_forward.1} parent=1 // pred_fallthru
      _
    // Predicated region
    $region18: #{qnetwork_forward.1} parent=1 // pred_check
      _
    $region19: #{qnetwork_forward.1} parent=1 // pred_check_branch
      %64 = sbr.rel (0) target = $region21
    $region20: #{qnetwork_forward.1} parent=1 // pred_region
      %66 = dma.done [#allocation3], 128
    $region21: #{qnetwork_forward.1} parent=1 // pred_fallthru
      _
    // Predicated region
    $region22: #{qnetwork_forward.1} parent=1 // pred_check
      _
    $region23: #{qnetwork_forward.1} parent=1 // pred_check_branch
      %68 = sbr.rel (0) target = $region25
    $region24: #{qnetwork_forward.1} parent=1 // pred_region
      %70 = dma.done [#allocation6], 256
    $region25: #{qnetwork_forward.1} parent=1 // pred_fallthru
      _
    // Predicated region
    $region26: #{qnetwork_forward.1} parent=1 // pred_check
      _
    $region27: #{qnetwork_forward.1} parent=1 // pred_check_branch
      %72 = sbr.rel (0) target = $region29
    $region28: #{qnetwork_forward.1} parent=1 // pred_region
      %74 = dma.done [#allocation6], 8192
    $region29: #{qnetwork_forward.1} parent=1 // pred_fallthru
      _
    // Predicated region
    $region30: #{qnetwork_forward.1} parent=1 // pred_check
      _
    $region31: #{qnetwork_forward.1} parent=1 // pred_check_branch
      %76 = sbr.rel (0) target = $region33
    $region32: #{qnetwork_forward.1} parent=1 // pred_region
      %78 = dma.done [#allocation9], 256
    $region33: #{qnetwork_forward.1} parent=1 // pred_fallthru
      _
    %v80 = vld [vmem:[#allocation2] sm:$0xff]
    %v81 = vpack.c.bf16 %v80, %v80
    %v82 = vld [vmem:[#allocation5] sm:$0xf]
    %v83 = vld [vmem:[#allocation5 + $0x4] sm:$0xf]
    %v84 = vld [vmem:[#allocation5 + $0x8] sm:$0xf]
    %v85 = vld [vmem:[#allocation5 + $0xc] sm:$0xf]
    %v86 = vld [vmem:[#allocation8] sm:$0x1]
    %v87 = vperm.slane %v86, 0
    %v92 = vunpack.c.l.b16 %v82
    %v93 = vunpack.c.l.b16 %v83
    %v94 = vunpack.c.l.b16 %v84
    %v95 = vunpack.c.l.b16 %v85
    %v96 = vpack.c.b16 %v93, %v92
    %v97 = vpack.c.b16 %v95, %v94
    %vm100 = vcmask 261120
    %v102 = vsel %vm100, %v81, 0
    %104 = vmatpush.bf16.msra.mxu0 0
    %105 = vmatpush.bf16.msra.mxu0 0
    %106 = vmatpush.bf16.msra.mxu0 0
    %107 = vmatpush.bf16.msra.mxu0 0
    %108 = vmatpush.bf16.msra.mxu0 0
    %109 = vmatpush.bf16.msra.mxu0 0
    %110 = vmatpush.bf16.msra.mxu0 %v97
    %111 = vmatpush.bf16.msra.mxu0 %v96
    %112 = vmatmul.bf16.gmra.mxu0 %v102
    %v113 = vpop.f32.mrf.mxu0
    %v114 = vadd.f32 %v87, %v113
    %v115 = vpop.f32.mrf.mxu0
    %116 = vdwg.mxu0
    %v117 = vmax.f32 %v114, 0.0
    %v118 = vpack.c.bf16 %v117, %v117
    %v119 = vld [vmem:[#allocation7] sm:$0xf]
    %v120 = vld [vmem:[#allocation7 + $0x4] sm:$0xf]
    %v121 = vld [vmem:[#allocation7 + $0x8] sm:$0xf]
    %v122 = vld [vmem:[#allocation7 + $0xc] sm:$0xf]
    %v123 = vld [vmem:[#allocation7 + $0x10] sm:$0xf]
    %v124 = vld [vmem:[#allocation7 + $0x14] sm:$0xf]
    %v125 = vld [vmem:[#allocation7 + $0x18] sm:$0xf]
    %v126 = vld [vmem:[#allocation7 + $0x1c] sm:$0xf]
    %v127 = vld [vmem:[#allocation7 + $0x20] sm:$0xf]
    %v128 = vld [vmem:[#allocation7 + $0x24] sm:$0xf]
    %v129 = vld [vmem:[#allocation7 + $0x28] sm:$0xf]
    %v130 = vld [vmem:[#allocation7 + $0x2c] sm:$0xf]
    %v131 = vld [vmem:[#allocation7 + $0x30] sm:$0xf]
    %v132 = vld [vmem:[#allocation7 + $0x34] sm:$0xf]
    %v133 = vld [vmem:[#allocation7 + $0x38] sm:$0xf]
    %v134 = vld [vmem:[#allocation7 + $0x3c] sm:$0xf]
    %v135 = vld [vmem:[#allocation8 + $0x1] sm:$0x1]
    %v136 = vperm.slane %v135, 0
    %v153 = vunpack.c.l.b16 %v119
    %v154 = vunpack.c.l.b16 %v120
    %v155 = vunpack.c.l.b16 %v121
    %v156 = vunpack.c.l.b16 %v122
    %v157 = vunpack.c.l.b16 %v123
    %v158 = vunpack.c.l.b16 %v124
    %v159 = vunpack.c.l.b16 %v125
    %v160 = vunpack.c.l.b16 %v126
    %v161 = vunpack.c.l.b16 %v127
    %v162 = vunpack.c.l.b16 %v128
    %v163 = vunpack.c.l.b16 %v129
    %v164 = vunpack.c.l.b16 %v130
    %v165 = vunpack.c.l.b16 %v131
    %v166 = vunpack.c.l.b16 %v132
    %v167 = vunpack.c.l.b16 %v133
    %v168 = vunpack.c.l.b16 %v134
    %v169 = vpack.c.b16 %v154, %v153
    %v170 = vpack.c.b16 %v156, %v155
    %v171 = vpack.c.b16 %v158, %v157
    %v172 = vpack.c.b16 %v160, %v159
    %v173 = vpack.c.b16 %v162, %v161
    %v174 = vpack.c.b16 %v164, %v163
    %v175 = vpack.c.b16 %v166, %v165
    %v176 = vpack.c.b16 %v168, %v167
    %185 = vmatpush.bf16.msra.mxu0 %v176
    %186 = vmatpush.bf16.msra.mxu0 %v175
    %187 = vmatpush.bf16.msra.mxu0 %v174
    %188 = vmatpush.bf16.msra.mxu0 %v173
    %189 = vmatpush.bf16.msra.mxu0 %v172
    %190 = vmatpush.bf16.msra.mxu0 %v171
    %191 = vmatpush.bf16.msra.mxu0 %v170
    %192 = vmatpush.bf16.msra.mxu0 %v169
    %193 = vmatmul.bf16.gmra.mxu0 %v118
    %v194 = vpop.f32.mrf.mxu0
    %v195 = vadd.f32 %v136, %v194
    %v196 = vpop.f32.mrf.mxu0
    %197 = vdwg.mxu0
    %v198 = vmax.f32 %v195, 0.0
    %v199 = vpack.c.bf16 %v198, %v198
    %s200 = scalar_lea.vmem [#allocation7], 64
    %v201 = vld [vmem:[%s200] sm:$0xf]
    %v202 = vld [vmem:[%s200 + $0x4] sm:$0xf]
    %v203 = vld [vmem:[%s200 + $0x8] sm:$0xf]
    %v204 = vld [vmem:[%s200 + $0xc] sm:$0xf]
    %v205 = vld [vmem:[%s200 + $0x10] sm:$0xf]
    %v206 = vld [vmem:[%s200 + $0x14] sm:$0xf]
    %v207 = vld [vmem:[%s200 + $0x18] sm:$0xf]
    %v208 = vld [vmem:[%s200 + $0x1c] sm:$0xf]
    %v209 = vld [vmem:[%s200 + $0x20] sm:$0xf]
    %v210 = vld [vmem:[%s200 + $0x24] sm:$0xf]
    %v211 = vld [vmem:[%s200 + $0x28] sm:$0xf]
    %v212 = vld [vmem:[%s200 + $0x2c] sm:$0xf]
    %v213 = vld [vmem:[%s200 + $0x30] sm:$0xf]
    %v214 = vld [vmem:[%s200 + $0x34] sm:$0xf]
    %v215 = vld [vmem:[%s200 + $0x38] sm:$0xf]
    %v216 = vld [vmem:[%s200 + $0x3c] sm:$0xf]
    %v217 = vld [vmem:[#allocation8 + $0x2] sm:$0x1]
    %v218 = vperm.slane %v217, 0
    %v235 = vunpack.c.l.b16 %v201
    %v236 = vunpack.c.l.b16 %v202
    %v237 = vunpack.c.l.b16 %v203
    %v238 = vunpack.c.l.b16 %v204
    %v239 = vunpack.c.l.b16 %v205
    %v240 = vunpack.c.l.b16 %v206
    %v241 = vunpack.c.l.b16 %v207
    %v242 = vunpack.c.l.b16 %v208
    %v243 = vunpack.c.l.b16 %v209
    %v244 = vunpack.c.l.b16 %v210
    %v245 = vunpack.c.l.b16 %v211
    %v246 = vunpack.c.l.b16 %v212
    %v247 = vunpack.c.l.b16 %v213
    %v248 = vunpack.c.l.b16 %v214
    %v249 = vunpack.c.l.b16 %v215
    %v250 = vunpack.c.l.b16 %v216
    %v251 = vpack.c.b16 %v236, %v235
    %v252 = vpack.c.b16 %v238, %v237
    %v253 = vpack.c.b16 %v240, %v239
    %v254 = vpack.c.b16 %v242, %v241
    %v255 = vpack.c.b16 %v244, %v243
    %v256 = vpack.c.b16 %v246, %v245
    %v257 = vpack.c.b16 %v248, %v247
    %v258 = vpack.c.b16 %v250, %v249
    %267 = vmatpush.bf16.msra.mxu0 %v258
    %268 = vmatpush.bf16.msra.mxu0 %v257
    %269 = vmatpush.bf16.msra.mxu0 %v256
    %270 = vmatpush.bf16.msra.mxu0 %v255
    %271 = vmatpush.bf16.msra.mxu0 %v254
    %272 = vmatpush.bf16.msra.mxu0 %v253
    %273 = vmatpush.bf16.msra.mxu0 %v252
    %274 = vmatpush.bf16.msra.mxu0 %v251
    %275 = vmatmul.bf16.gmra.mxu0 %v199
    %v276 = vpop.f32.mrf.mxu0
    %v277 = vadd.f32 %v218, %v276
    %v278 = vpop.f32.mrf.mxu0
    %279 = vdwg.mxu0
    %v280 = vmax.f32 %v277, 0.0
    %v281 = vpack.c.bf16 %v280, %v280
    %s282 = scalar_lea.vmem [#allocation7], 128
    %v283 = vld [vmem:[%s282] sm:$0xf]
    %v284 = vld [vmem:[%s282 + $0x4] sm:$0xf]
    %v285 = vld [vmem:[%s282 + $0x8] sm:$0xf]
    %v286 = vld [vmem:[%s282 + $0xc] sm:$0xf]
    %v287 = vld [vmem:[%s282 + $0x10] sm:$0xf]
    %v288 = vld [vmem:[%s282 + $0x14] sm:$0xf]
    %v289 = vld [vmem:[%s282 + $0x18] sm:$0xf]
    %v290 = vld [vmem:[%s282 + $0x1c] sm:$0xf]
    %v291 = vld [vmem:[%s282 + $0x20] sm:$0xf]
    %v292 = vld [vmem:[%s282 + $0x24] sm:$0xf]
    %v293 = vld [vmem:[%s282 + $0x28] sm:$0xf]
    %v294 = vld [vmem:[%s282 + $0x2c] sm:$0xf]
    %v295 = vld [vmem:[%s282 + $0x30] sm:$0xf]
    %v296 = vld [vmem:[%s282 + $0x34] sm:$0xf]
    %v297 = vld [vmem:[%s282 + $0x38] sm:$0xf]
    %v298 = vld [vmem:[%s282 + $0x3c] sm:$0xf]
    %v299 = vld [vmem:[#allocation8 + $0x3] sm:$0x1]
    %v300 = vperm.slane %v299, 0
    %v317 = vunpack.c.l.b16 %v283
    %v318 = vunpack.c.l.b16 %v284
    %v319 = vunpack.c.l.b16 %v285
    %v320 = vunpack.c.l.b16 %v286
    %v321 = vunpack.c.l.b16 %v287
    %v322 = vunpack.c.l.b16 %v288
    %v323 = vunpack.c.l.b16 %v289
    %v324 = vunpack.c.l.b16 %v290
    %v325 = vunpack.c.l.b16 %v291
    %v326 = vunpack.c.l.b16 %v292
    %v327 = vunpack.c.l.b16 %v293
    %v328 = vunpack.c.l.b16 %v294
    %v329 = vunpack.c.l.b16 %v295
    %v330 = vunpack.c.l.b16 %v296
    %v331 = vunpack.c.l.b16 %v297
    %v332 = vunpack.c.l.b16 %v298
    %v333 = vpack.c.b16 %v318, %v317
    %v334 = vpack.c.b16 %v320, %v319
    %v335 = vpack.c.b16 %v322, %v321
    %v336 = vpack.c.b16 %v324, %v323
    %v337 = vpack.c.b16 %v326, %v325
    %v338 = vpack.c.b16 %v328, %v327
    %v339 = vpack.c.b16 %v330, %v329
    %v340 = vpack.c.b16 %v332, %v331
    %349 = vmatpush.bf16.msra.mxu0 %v340
    %350 = vmatpush.bf16.msra.mxu0 %v339
    %351 = vmatpush.bf16.msra.mxu0 %v338
    %352 = vmatpush.bf16.msra.mxu0 %v337
    %353 = vmatpush.bf16.msra.mxu0 %v336
    %354 = vmatpush.bf16.msra.mxu0 %v335
    %355 = vmatpush.bf16.msra.mxu0 %v334
    %356 = vmatpush.bf16.msra.mxu0 %v333
    %357 = vmatmul.bf16.gmra.mxu0 %v281
    %v358 = vpop.f32.mrf.mxu0
    %v359 = vadd.f32 %v300, %v358
    %v360 = vpop.f32.mrf.mxu0
    %361 = vdwg.mxu0
    %v362 = vmax.f32 %v359, 0.0
    %v363 = vpack.c.bf16 %v362, %v362
    %s364 = scalar_lea.vmem [#allocation7], 192
    %v365 = vld [vmem:[%s364] sm:$0xf]
    %v366 = vld [vmem:[%s364 + $0x4] sm:$0xf]
    %v367 = vld [vmem:[%s364 + $0x8] sm:$0xf]
    %v368 = vld [vmem:[%s364 + $0xc] sm:$0xf]
    %v369 = vld [vmem:[%s364 + $0x10] sm:$0xf]
    %v370 = vld [vmem:[%s364 + $0x14] sm:$0xf]
    %v371 = vld [vmem:[%s364 + $0x18] sm:$0xf]
    %v372 = vld [vmem:[%s364 + $0x1c] sm:$0xf]
    %v373 = vld [vmem:[%s364 + $0x20] sm:$0xf]
    %v374 = vld [vmem:[%s364 + $0x24] sm:$0xf]
    %v375 = vld [vmem:[%s364 + $0x28] sm:$0xf]
    %v376 = vld [vmem:[%s364 + $0x2c] sm:$0xf]
    %v377 = vld [vmem:[%s364 + $0x30] sm:$0xf]
    %v378 = vld [vmem:[%s364 + $0x34] sm:$0xf]
    %v379 = vld [vmem:[%s364 + $0x38] sm:$0xf]
    %v380 = vld [vmem:[%s364 + $0x3c] sm:$0xf]
    %v381 = vld [vmem:[#allocation8 + $0x4] sm:$0x1]
    %v382 = vperm.slane %v381, 0
    %v399 = vunpack.c.l.b16 %v365
    %v400 = vunpack.c.l.b16 %v366
    %v401 = vunpack.c.l.b16 %v367
    %v402 = vunpack.c.l.b16 %v368
    %v403 = vunpack.c.l.b16 %v369
    %v404 = vunpack.c.l.b16 %v370
    %v405 = vunpack.c.l.b16 %v371
    %v406 = vunpack.c.l.b16 %v372
    %v407 = vunpack.c.l.b16 %v373
    %v408 = vunpack.c.l.b16 %v374
    %v409 = vunpack.c.l.b16 %v375
    %v410 = vunpack.c.l.b16 %v376
    %v411 = vunpack.c.l.b16 %v377
    %v412 = vunpack.c.l.b16 %v378
    %v413 = vunpack.c.l.b16 %v379
    %v414 = vunpack.c.l.b16 %v380
    %v415 = vpack.c.b16 %v400, %v399
    %v416 = vpack.c.b16 %v402, %v401
    %v417 = vpack.c.b16 %v404, %v403
    %v418 = vpack.c.b16 %v406, %v405
    %v419 = vpack.c.b16 %v408, %v407
    %v420 = vpack.c.b16 %v410, %v409
    %v421 = vpack.c.b16 %v412, %v411
    %v422 = vpack.c.b16 %v414, %v413
    %431 = vmatpush.bf16.msra.mxu0 %v422
    %432 = vmatpush.bf16.msra.mxu0 %v421
    %433 = vmatpush.bf16.msra.mxu0 %v420
    %434 = vmatpush.bf16.msra.mxu0 %v419
    %435 = vmatpush.bf16.msra.mxu0 %v418
    %436 = vmatpush.bf16.msra.mxu0 %v417
    %437 = vmatpush.bf16.msra.mxu0 %v416
    %438 = vmatpush.bf16.msra.mxu0 %v415
    %439 = vmatmul.bf16.gmra.mxu0 %v363
    %v440 = vpop.f32.mrf.mxu0
    %v441 = vadd.f32 %v382, %v440
    %v442 = vpop.f32.mrf.mxu0
    %443 = vdwg.mxu0
    %v444 = vmax.f32 %v441, 0.0
    %v445 = vpack.c.bf16 %v444, %v444
    %s446 = scalar_lea.vmem [#allocation7], 256
    %v447 = vld [vmem:[%s446] sm:$0xf]
    %v448 = vld [vmem:[%s446 + $0x4] sm:$0xf]
    %v449 = vld [vmem:[%s446 + $0x8] sm:$0xf]
    %v450 = vld [vmem:[%s446 + $0xc] sm:$0xf]
    %v451 = vld [vmem:[%s446 + $0x10] sm:$0xf]
    %v452 = vld [vmem:[%s446 + $0x14] sm:$0xf]
    %v453 = vld [vmem:[%s446 + $0x18] sm:$0xf]
    %v454 = vld [vmem:[%s446 + $0x1c] sm:$0xf]
    %v455 = vld [vmem:[%s446 + $0x20] sm:$0xf]
    %v456 = vld [vmem:[%s446 + $0x24] sm:$0xf]
    %v457 = vld [vmem:[%s446 + $0x28] sm:$0xf]
    %v458 = vld [vmem:[%s446 + $0x2c] sm:$0xf]
    %v459 = vld [vmem:[%s446 + $0x30] sm:$0xf]
    %v460 = vld [vmem:[%s446 + $0x34] sm:$0xf]
    %v461 = vld [vmem:[%s446 + $0x38] sm:$0xf]
    %v462 = vld [vmem:[%s446 + $0x3c] sm:$0xf]
    %v463 = vld [vmem:[#allocation8 + $0x5] sm:$0x1]
    %v464 = vperm.slane %v463, 0
    %v481 = vunpack.c.l.b16 %v447
    %v482 = vunpack.c.l.b16 %v448
    %v483 = vunpack.c.l.b16 %v449
    %v484 = vunpack.c.l.b16 %v450
    %v485 = vunpack.c.l.b16 %v451
    %v486 = vunpack.c.l.b16 %v452
    %v487 = vunpack.c.l.b16 %v453
    %v488 = vunpack.c.l.b16 %v454
    %v489 = vunpack.c.l.b16 %v455
    %v490 = vunpack.c.l.b16 %v456
    %v491 = vunpack.c.l.b16 %v457
    %v492 = vunpack.c.l.b16 %v458
    %v493 = vunpack.c.l.b16 %v459
    %v494 = vunpack.c.l.b16 %v460
    %v495 = vunpack.c.l.b16 %v461
    %v496 = vunpack.c.l.b16 %v462
    %v497 = vpack.c.b16 %v482, %v481
    %v498 = vpack.c.b16 %v484, %v483
    %v499 = vpack.c.b16 %v486, %v485
    %v500 = vpack.c.b16 %v488, %v487
    %v501 = vpack.c.b16 %v490, %v489
    %v502 = vpack.c.b16 %v492, %v491
    %v503 = vpack.c.b16 %v494, %v493
    %v504 = vpack.c.b16 %v496, %v495
    %513 = vmatpush.bf16.msra.mxu0 %v504
    %514 = vmatpush.bf16.msra.mxu0 %v503
    %515 = vmatpush.bf16.msra.mxu0 %v502
    %516 = vmatpush.bf16.msra.mxu0 %v501
    %517 = vmatpush.bf16.msra.mxu0 %v500
    %518 = vmatpush.bf16.msra.mxu0 %v499
    %519 = vmatpush.bf16.msra.mxu0 %v498
    %520 = vmatpush.bf16.msra.mxu0 %v497
    %521 = vmatmul.bf16.gmra.mxu0 %v445
    %v522 = vpop.f32.mrf.mxu0
    %v523 = vadd.f32 %v464, %v522
    %v524 = vpop.f32.mrf.mxu0
    %525 = vdwg.mxu0
    %v526 = vmax.f32 %v523, 0.0
    %v527 = vpack.c.bf16 %v526, %v526
    %s528 = scalar_lea.vmem [#allocation7], 320
    %v529 = vld [vmem:[%s528] sm:$0xf]
    %v530 = vld [vmem:[%s528 + $0x4] sm:$0xf]
    %v531 = vld [vmem:[%s528 + $0x8] sm:$0xf]
    %v532 = vld [vmem:[%s528 + $0xc] sm:$0xf]
    %v533 = vld [vmem:[%s528 + $0x10] sm:$0xf]
    %v534 = vld [vmem:[%s528 + $0x14] sm:$0xf]
    %v535 = vld [vmem:[%s528 + $0x18] sm:$0xf]
    %v536 = vld [vmem:[%s528 + $0x1c] sm:$0xf]
    %v537 = vld [vmem:[%s528 + $0x20] sm:$0xf]
    %v538 = vld [vmem:[%s528 + $0x24] sm:$0xf]
    %v539 = vld [vmem:[%s528 + $0x28] sm:$0xf]
    %v540 = vld [vmem:[%s528 + $0x2c] sm:$0xf]
    %v541 = vld [vmem:[%s528 + $0x30] sm:$0xf]
    %v542 = vld [vmem:[%s528 + $0x34] sm:$0xf]
    %v543 = vld [vmem:[%s528 + $0x38] sm:$0xf]
    %v544 = vld [vmem:[%s528 + $0x3c] sm:$0xf]
    %v545 = vld [vmem:[#allocation8 + $0x6] sm:$0x1]
    %v546 = vperm.slane %v545, 0
    %v563 = vunpack.c.l.b16 %v529
    %v564 = vunpack.c.l.b16 %v530
    %v565 = vunpack.c.l.b16 %v531
    %v566 = vunpack.c.l.b16 %v532
    %v567 = vunpack.c.l.b16 %v533
    %v568 = vunpack.c.l.b16 %v534
    %v569 = vunpack.c.l.b16 %v535
    %v570 = vunpack.c.l.b16 %v536
    %v571 = vunpack.c.l.b16 %v537
    %v572 = vunpack.c.l.b16 %v538
    %v573 = vunpack.c.l.b16 %v539
    %v574 = vunpack.c.l.b16 %v540
    %v575 = vunpack.c.l.b16 %v541
    %v576 = vunpack.c.l.b16 %v542
    %v577 = vunpack.c.l.b16 %v543
    %v578 = vunpack.c.l.b16 %v544
    %v579 = vpack.c.b16 %v564, %v563
    %v580 = vpack.c.b16 %v566, %v565
    %v581 = vpack.c.b16 %v568, %v567
    %v582 = vpack.c.b16 %v570, %v569
    %v583 = vpack.c.b16 %v572, %v571
    %v584 = vpack.c.b16 %v574, %v573
    %v585 = vpack.c.b16 %v576, %v575
    %v586 = vpack.c.b16 %v578, %v577
    %595 = vmatpush.bf16.msra.mxu0 %v586
    %596 = vmatpush.bf16.msra.mxu0 %v585
    %597 = vmatpush.bf16.msra.mxu0 %v584
    %598 = vmatpush.bf16.msra.mxu0 %v583
    %599 = vmatpush.bf16.msra.mxu0 %v582
    %600 = vmatpush.bf16.msra.mxu0 %v581
    %601 = vmatpush.bf16.msra.mxu0 %v580
    %602 = vmatpush.bf16.msra.mxu0 %v579
    %603 = vmatmul.bf16.gmra.mxu0 %v527
    %v604 = vpop.f32.mrf.mxu0
    %v605 = vadd.f32 %v546, %v604
    %v606 = vpop.f32.mrf.mxu0
    %607 = vdwg.mxu0
    %v608 = vmax.f32 %v605, 0.0
    %v609 = vpack.c.bf16 %v608, %v608
    %s610 = scalar_lea.vmem [#allocation7], 384
    %v611 = vld [vmem:[%s610] sm:$0xf]
    %v612 = vld [vmem:[%s610 + $0x4] sm:$0xf]
    %v613 = vld [vmem:[%s610 + $0x8] sm:$0xf]
    %v614 = vld [vmem:[%s610 + $0xc] sm:$0xf]
    %v615 = vld [vmem:[%s610 + $0x10] sm:$0xf]
    %v616 = vld [vmem:[%s610 + $0x14] sm:$0xf]
    %v617 = vld [vmem:[%s610 + $0x18] sm:$0xf]
    %v618 = vld [vmem:[%s610 + $0x1c] sm:$0xf]
    %v619 = vld [vmem:[%s610 + $0x20] sm:$0xf]
    %v620 = vld [vmem:[%s610 + $0x24] sm:$0xf]
    %v621 = vld [vmem:[%s610 + $0x28] sm:$0xf]
    %v622 = vld [vmem:[%s610 + $0x2c] sm:$0xf]
    %v623 = vld [vmem:[%s610 + $0x30] sm:$0xf]
    %v624 = vld [vmem:[%s610 + $0x34] sm:$0xf]
    %v625 = vld [vmem:[%s610 + $0x38] sm:$0xf]
    %v626 = vld [vmem:[%s610 + $0x3c] sm:$0xf]
    %v627 = vld [vmem:[#allocation8 + $0x7] sm:$0x1]
    %v628 = vperm.slane %v627, 0
    %v645 = vunpack.c.l.b16 %v611
    %v646 = vunpack.c.l.b16 %v612
    %v647 = vunpack.c.l.b16 %v613
    %v648 = vunpack.c.l.b16 %v614
    %v649 = vunpack.c.l.b16 %v615
    %v650 = vunpack.c.l.b16 %v616
    %v651 = vunpack.c.l.b16 %v617
    %v652 = vunpack.c.l.b16 %v618
    %v653 = vunpack.c.l.b16 %v619
    %v654 = vunpack.c.l.b16 %v620
    %v655 = vunpack.c.l.b16 %v621
    %v656 = vunpack.c.l.b16 %v622
    %v657 = vunpack.c.l.b16 %v623
    %v658 = vunpack.c.l.b16 %v624
    %v659 = vunpack.c.l.b16 %v625
    %v660 = vunpack.c.l.b16 %v626
    %v661 = vpack.c.b16 %v646, %v645
    %v662 = vpack.c.b16 %v648, %v647
    %v663 = vpack.c.b16 %v650, %v649
    %v664 = vpack.c.b16 %v652, %v651
    %v665 = vpack.c.b16 %v654, %v653
    %v666 = vpack.c.b16 %v656, %v655
    %v667 = vpack.c.b16 %v658, %v657
    %v668 = vpack.c.b16 %v660, %v659
    %677 = vmatpush.bf16.msra.mxu0 %v668
    %678 = vmatpush.bf16.msra.mxu0 %v667
    %679 = vmatpush.bf16.msra.mxu0 %v666
    %680 = vmatpush.bf16.msra.mxu0 %v665
    %681 = vmatpush.bf16.msra.mxu0 %v664
    %682 = vmatpush.bf16.msra.mxu0 %v663
    %683 = vmatpush.bf16.msra.mxu0 %v662
    %684 = vmatpush.bf16.msra.mxu0 %v661
    %685 = vmatmul.bf16.gmra.mxu0 %v609
    %v686 = vpop.f32.mrf.mxu0
    %v687 = vadd.f32 %v628, %v686
    %v688 = vpop.f32.mrf.mxu0
    %689 = vdwg.mxu0
    %v690 = vmax.f32 %v687, 0.0
    %v691 = vpack.c.bf16 %v690, %v690
    %s692 = scalar_lea.vmem [#allocation7], 448
    %v693 = vld [vmem:[%s692] sm:$0xf]
    %v694 = vld [vmem:[%s692 + $0x4] sm:$0xf]
    %v695 = vld [vmem:[%s692 + $0x8] sm:$0xf]
    %v696 = vld [vmem:[%s692 + $0xc] sm:$0xf]
    %v697 = vld [vmem:[%s692 + $0x10] sm:$0xf]
    %v698 = vld [vmem:[%s692 + $0x14] sm:$0xf]
    %v699 = vld [vmem:[%s692 + $0x18] sm:$0xf]
    %v700 = vld [vmem:[%s692 + $0x1c] sm:$0xf]
    %v701 = vld [vmem:[%s692 + $0x20] sm:$0xf]
    %v702 = vld [vmem:[%s692 + $0x24] sm:$0xf]
    %v703 = vld [vmem:[%s692 + $0x28] sm:$0xf]
    %v704 = vld [vmem:[%s692 + $0x2c] sm:$0xf]
    %v705 = vld [vmem:[%s692 + $0x30] sm:$0xf]
    %v706 = vld [vmem:[%s692 + $0x34] sm:$0xf]
    %v707 = vld [vmem:[%s692 + $0x38] sm:$0xf]
    %v708 = vld [vmem:[%s692 + $0x3c] sm:$0xf]
    %v709 = vld [vmem:[#allocation8 + $0x8] sm:$0x1]
    %v710 = vperm.slane %v709, 0
    %v727 = vunpack.c.l.b16 %v693
    %v728 = vunpack.c.l.b16 %v694
    %v729 = vunpack.c.l.b16 %v695
    %v730 = vunpack.c.l.b16 %v696
    %v731 = vunpack.c.l.b16 %v697
    %v732 = vunpack.c.l.b16 %v698
    %v733 = vunpack.c.l.b16 %v699
    %v734 = vunpack.c.l.b16 %v700
    %v735 = vunpack.c.l.b16 %v701
    %v736 = vunpack.c.l.b16 %v702
    %v737 = vunpack.c.l.b16 %v703
    %v738 = vunpack.c.l.b16 %v704
    %v739 = vunpack.c.l.b16 %v705
    %v740 = vunpack.c.l.b16 %v706
    %v741 = vunpack.c.l.b16 %v707
    %v742 = vunpack.c.l.b16 %v708
    %v743 = vpack.c.b16 %v728, %v727
    %v744 = vpack.c.b16 %v730, %v729
    %v745 = vpack.c.b16 %v732, %v731
    %v746 = vpack.c.b16 %v734, %v733
    %v747 = vpack.c.b16 %v736, %v735
    %v748 = vpack.c.b16 %v738, %v737
    %v749 = vpack.c.b16 %v740, %v739
    %v750 = vpack.c.b16 %v742, %v741
    %759 = vmatpush.bf16.msra.mxu0 %v750
    %760 = vmatpush.bf16.msra.mxu0 %v749
    %761 = vmatpush.bf16.msra.mxu0 %v748
    %762 = vmatpush.bf16.msra.mxu0 %v747
    %763 = vmatpush.bf16.msra.mxu0 %v746
    %764 = vmatpush.bf16.msra.mxu0 %v745
    %765 = vmatpush.bf16.msra.mxu0 %v744
    %766 = vmatpush.bf16.msra.mxu0 %v743
    %767 = vmatmul.bf16.gmra.mxu0 %v691
    %v768 = vpop.f32.mrf.mxu0
    %v769 = vadd.f32 %v710, %v768
    %v770 = vpop.f32.mrf.mxu0
    %771 = vdwg.mxu0
    %v772 = vlaneseq
    %v773 = vand.u32 %v772, 127
    %vm774 = vcmp.lt.s32.totalorder %v773, 8
    %v775 = vsel %vm774, %v769, 0.0
    %776 = vadd.xlane.f32.xlu0 %v775
    %v777 = vpop.xlane.xlu0 %776
    %v778 = vmul.f32 %v777, 0.125
    %780 = vset.pattern.permute.xlu0 8
    %781 = vperm.xlu0 %780, %v769
    %v782 = vpop.permute.xlu0 %781
    %v784 = vadd.f32 %v769, %v782
    %v785 = vsub.f32 %v784, %v778
    %v786 = vsel %vm774, %v785, 0.0
    %787 = vst [vmem:[#allocation10] sm:$0xff] %v786
    // Predicated region
    $region34: #{qnetwork_forward.1} parent=1 // pred_check
      _
    $region35: #{qnetwork_forward.1} parent=1 // pred_check_branch
      %789 = sbr.rel (0) target = $region37
    $region36: #{qnetwork_forward.1} parent=1 // pred_region
      %791 = vsyncadd [#allocation4], 0
      %s793 = sshll.u32 [#allocation10], 4
      %s794 = int_to_ptr.vmem [resolvable:$true] %s793
      %s795 = sshll.u32 %s4, 4
      %s796 = int_to_ptr.hbm [resolvable:$true] %s795
      %798 = dma.vmem_to_hbm [thread:$0]  %s794, 128, %s796, [#allocation4]
    $region37: #{qnetwork_forward.1} parent=1 // pred_fallthru
      _
    // Predicated region
    $region38: #{qnetwork_forward.1} parent=1 // pred_check
      _
    $region39: #{qnetwork_forward.1} parent=1 // pred_check_branch
      %800 = sbr.rel (0) target = $region41
    $region40: #{qnetwork_forward.1} parent=1 // pred_region
      %802 = dma.done [#allocation4], 128
    $region41: #{qnetwork_forward.1} parent=1 // pred_fallthru
      _
    %803 = vsyncpa [#allocation3], 1
    %804 = vsyncpa [#allocation6], 1
    %805 = vsyncpa [#allocation9], 1
    %806 = vsyncpa [#allocation4], 1

</llo_original>
